<compile_context>
chip_gen: v7x
topology: tpu7x:2x2x1
jax: 0.10.0
libtpu: 0.0.40
codegen_flags: <defaults>
</compile_context>

<pallas_src>
import functools

import jax
import jax.numpy as jnp
from jax.experimental import pallas as pl
from jax.experimental.pallas import tpu as pltpu

_SUBLANE = 8  # f32 sublane tiling (second-to-last dim)


def _round_up(x, m):
    return ((x + m - 1) // m) * m


def _mlp_kernel(x_ref, w1_ref, b1_ref, w2_ref, b2_ref, w3_ref, b3_ref, o_ref):
    """Fused 3-layer MLP for one batch tile.

    x_ref : (TB, D_in)  f32
    w1_ref: (D_in, D_in)   b1_ref: (1, D_in)  f32
    w2_ref: (D_in, D_in)   b2_ref: (1, D_in)  f32
    w3_ref: (D_in, D_out)  b3_ref: (1, D_out) f32
    o_ref : (TB, D_out)
    Weights may be f32 or bf16; accumulation is always f32 on the MXU.
    """
    cd = w1_ref.dtype
    x = x_ref[...].astype(cd)  # in-kernel cast: no extra wrapper HBM pass over x

    # Layer 1: Linear + ReLU
    h1 = jnp.dot(x, w1_ref[...], preferred_element_type=jnp.float32) + b1_ref[...]
    h1 = jnp.maximum(h1, 0.0)

    # Layer 2: Linear + LeakyReLU (PyTorch default negative_slope = 0.01)
    h2 = jnp.dot(h1.astype(cd), w2_ref[...],
                 preferred_element_type=jnp.float32) + b2_ref[...]
    h2 = jnp.where(h2 >= 0.0, h2, 0.01 * h2)

    # Layer 3: Linear (no activation)
    h3 = jnp.dot(h2.astype(cd), w3_ref[...],
                 preferred_element_type=jnp.float32) + b3_ref[...]
    o_ref[...] = h3.astype(o_ref.dtype)


def prepare_params(params, use_bf16=False):
    """One-time conversion of the raw parameter dict into kernel operands.

    Call ONCE outside the per-step path: weights are cast (optionally to bf16,
    valid on v5e/v6e/v7x) here instead of on every forward call; biases become
    (1, d) f32 row tiles.  Weights are stored (in, out), i.e. already
    transposed w.r.t. torch's nn.Linear.weight.
    """
    wdt = jnp.bfloat16 if use_bf16 else jnp.float32
    return {
        "w1": params["w1"].astype(wdt),
        "w2": params["w2"].astype(wdt),
        "w3": params["w3"].astype(wdt),
        "b1": params["b1"].reshape(1, -1).astype(jnp.float32),
        "b2": params["b2"].reshape(1, -1).astype(jnp.float32),
        "b3": params["b3"].reshape(1, -1).astype(jnp.float32),
    }


@functools.partial(
    jax.jit, static_argnames=("block_b", "out_dtype", "single_buffer_weights"))
def generator_enc_forward(x, prep, block_b=512, out_dtype=jnp.float32,
                          single_buffer_weights=False):
    """Forward pass of GeneratorEnc.

    x    : (B, D_in) float32
    prep : output of prepare_params(...)
    block_b: max batch rows per grid step (big tiles amortize ~0.35 us/step).
    single_buffer_weights: single-buffer the resident weights (v7x / large D_in).
    """
    B, d_in = x.shape
    d_out = prep["w3"].shape[1]
    w1, w2, w3 = prep["w1"], prep["w2"], prep["w3"]
    b1, b2, b3 = prep["b1"], prep["b2"], prep["b3"]

    # Batch tile: at most block_b rows; also capped at ceil(B/2) (rounded to a
    # sublane multiple) so the grid has >= 2 steps whenever B > 8 -> both v7x
    # TensorCores are used.  Trailing partial blocks are handled by Pallas.
    tb = max(_SUBLANE, min(_round_up(block_b, _SUBLANE),
                           _round_up(pl.cdiv(B, 2), _SUBLANE)))
    grid = (pl.cdiv(B, tb),)

    def w_spec(shape):
        # Constant index_map -> weights are DMA'd once and stay VMEM-resident.
        if single_buffer_weights:
            return pl.BlockSpec(shape, lambda i: (0, 0),
                                pipeline_mode=pl.Buffered(1))
        return pl.BlockSpec(shape, lambda i: (0, 0))

    wbytes = sum(int(a.size) * a.dtype.itemsize for a in (w1, w2, w3, b1, b2, b3))
    wbuf = 1 if single_buffer_weights else 2
    io_bytes = 2 * tb * (d_in * x.dtype.itemsize
                         + d_out * jnp.dtype(out_dtype).itemsize)
    vmem_limit = int(min(100 * 2**20, max(4 * (wbuf * wbytes + io_bytes),
                                          16 * 2**20)))

    cost = pl.CostEstimate(
        flops=2 * B * (2 * d_in * d_in + d_in * d_out),
        transcendentals=0,
        bytes_accessed=int(B * d_in * x.dtype.itemsize + wbytes
                           + B * d_out * jnp.dtype(out_dtype).itemsize),
    )

    return pl.pallas_call(
        _mlp_kernel,
        out_shape=jax.ShapeDtypeStruct((B, d_out), out_dtype),
        grid_spec=pltpu.PrefetchScalarGridSpec(
            num_scalar_prefetch=0,
            grid=grid,
            in_specs=[
                pl.BlockSpec((tb, d_in), lambda i: (i, 0)),   # x tile (f32)
                w_spec((d_in, d_in)),                          # w1 (resident)
                w_spec((1, d_in)),                             # b1
                w_spec((d_in, d_in)),                          # w2
                w_spec((1, d_in)),                             # b2
                w_spec((d_in, d_out)),                         # w3
                w_spec((1, d_out)),                            # b3
            ],
            out_specs=pl.BlockSpec((tb, d_out), lambda i: (i, 0)),
        ),
        compiler_params=pltpu.CompilerParams(
            # batch axis is embarrassingly parallel -> megacore sharding (v7x).
            dimension_semantics=("parallel",),
            vmem_limit_bytes=vmem_limit,
        ),
        cost_estimate=cost,
    )(x, w1, b1, w2, b2, w3, b3)


def init_params(key, input_size, output_size):
    """PyTorch nn.Linear-style init (uniform +/- 1/sqrt(fan_in)), weights (in, out)."""
    ks = jax.random.split(key, 6)

    def lin(kw, kb, fan_in, fan_out):
        bound = 1.0 / jnp.sqrt(fan_in)
        w = jax.random.uniform(kw, (fan_in, fan_out), jnp.float32, -bound, bound)
        b = jax.random.uniform(kb, (fan_out,), jnp.float32, -bound, bound)
        return w, b

    w1, b1 = lin(ks[0], ks[1], input_size, input_size)
    w2, b2 = lin(ks[2], ks[3], input_size, input_size)
    w3, b3 = lin(ks[4], ks[5], input_size, output_size)
    return {"w1": w1, "b1": b1, "w2": w2, "b2": b2, "w3": w3, "b3": b3}


def _reference_forward(x, params, use_bf16=False):
    """Plain-JAX reference matching the PyTorch module semantics."""
    cd = jnp.bfloat16 if use_bf16 else jnp.float32

    def lin(h, w, b):
        return jnp.dot(h.astype(cd), w.astype(cd),
                       preferred_element_type=jnp.float32) + b

    h = lin(x, params["w1"], params["b1"])
    h = jnp.maximum(h, 0.0)
    h = lin(h, params["w2"], params["b2"])
    h = jnp.where(h >= 0.0, h, 0.01 * h)
    h = lin(h, params["w3"], params["b3"])
    return h


if __name__ == "__main__":
    key = jax.random.PRNGKey(0)
    k_x, k_p, k_x2, k_x3 = jax.random.split(key, 4)

    input_size = 32
    output_size = 16
    params = init_params(k_p, input_size, output_size)

    # One-time parameter prep (cast / bias reshape) outside the per-call path.
    prep_f32 = prepare_params(params, use_bf16=False)
    prep_bf16 = prepare_params(params, use_bf16=True)

    # --- small batch, f32 weights (single grid step) ---
    x = jax.random.normal(k_x, (8, input_size), dtype=jnp.float32)
    out = jax.block_until_ready(generator_enc_forward(x, prep_f32))
    ref = _reference_forward(x, params)
    assert out.shape == (8, output_size)
    assert jnp.allclose(out, ref, atol=2e-2, rtol=2e-2), "f32 small-batch mismatch"

    # --- ragged batch: partial trailing block, grid of 2 (masked boundary store) ---
    x2 = jax.random.normal(k_x2, (13, input_size), dtype=jnp.float32)
    out2 = jax.block_until_ready(generator_enc_forward(x2, prep_f32))
    ref2 = _reference_forward(x2, params)
    assert out2.shape == (13, output_size)
    assert jnp.allclose(out2, ref2, atol=2e-2, rtol=2e-2), "f32 ragged-batch mismatch"

    # --- larger batch, bf16 weights (valid on v5e/v6e/v7x; f32 accumulation) ---
    x3 = jax.random.normal(k_x3, (256, input_size), dtype=jnp.float32)
    out3 = jax.block_until_ready(generator_enc_forward(x3, prep_bf16, block_b=512))
    ref3 = _reference_forward(x3, params, use_bf16=True)
    assert out3.shape == (256, output_size)
    assert jnp.allclose(out3, ref3, atol=3e-2, rtol=3e-2), "bf16 mismatch"

    print("KERNEL_OK")
</pallas_src>

<mosaic_0001>
module attributes {stable_mosaic.version = 11 : i64} {
  func.func @_mlp_kernel(%arg0: i32, %arg1: memref<8x32xf32, #tpu.memory_space<vmem>>, %arg2: memref<32x32xf32, #tpu.memory_space<vmem>>, %arg3: memref<1x32xf32, #tpu.memory_space<vmem>>, %arg4: memref<32x32xf32, #tpu.memory_space<vmem>>, %arg5: memref<1x32xf32, #tpu.memory_space<vmem>>, %arg6: memref<32x16xf32, #tpu.memory_space<vmem>>, %arg7: memref<1x16xf32, #tpu.memory_space<vmem>>, %arg8: memref<8x16xf32, #tpu.memory_space<vmem>>) attributes {dimension_semantics = [#tpu.dimension_semantics<parallel>], iteration_bounds = array<i64: 1>, scalar_prefetch = 0 : i64, scratch_operands = 0 : i64, tpu.core_type = #tpu.core_type<tc>, window_params = [{transform_indices = @transform_0, window_bounds = array<i64: 8, 32>}, {pipeline_mode = #tpu.pipeline_mode<synchronous>, transform_indices = @transform_1, window_bounds = array<i64: 32, 32>}, {pipeline_mode = #tpu.pipeline_mode<synchronous>, transform_indices = @transform_2, window_bounds = array<i64: 1, 32>}, {pipeline_mode = #tpu.pipeline_mode<synchronous>, transform_indices = @transform_3, window_bounds = array<i64: 32, 32>}, {pipeline_mode = #tpu.pipeline_mode<synchronous>, transform_indices = @transform_4, window_bounds = array<i64: 1, 32>}, {pipeline_mode = #tpu.pipeline_mode<synchronous>, transform_indices = @transform_5, window_bounds = array<i64: 32, 16>}, {pipeline_mode = #tpu.pipeline_mode<synchronous>, transform_indices = @transform_6, window_bounds = array<i64: 1, 16>}, {transform_indices = @transform_7, window_bounds = array<i64: 8, 16>}]} {
    %c0 = arith.constant 0 : index
    %c0_0 = arith.constant 0 : index
    %0 = vector.load %arg1[%c0, %c0_0] : memref<8x32xf32, #tpu.memory_space<vmem>>, vector<8x32xf32>
    %c0_1 = arith.constant 0 : index
    %c0_2 = arith.constant 0 : index
    %1 = vector.load %arg2[%c0_1, %c0_2] : memref<32x32xf32, #tpu.memory_space<vmem>>, vector<32x32xf32>
    %cst = arith.constant dense<0.000000e+00> : vector<8x32xf32>
    %2 = tpu.matmul %0, %1, %cst {dimension_numbers = #tpu.dot_dimension_numbers<[1], [0], [0], [1], [0, 0, 1, 1], [], []>} : vector<8x32xf32>, vector<32x32xf32>, vector<8x32xf32> -> vector<8x32xf32>
    %c0_3 = arith.constant 0 : index
    %c0_4 = arith.constant 0 : index
    %3 = vector.load %arg3[%c0_3, %c0_4] : memref<1x32xf32, #tpu.memory_space<vmem>>, vector<1x32xf32>
    %4 = vector.broadcast %3 : vector<1x32xf32> to vector<8x32xf32>
    %5 = arith.addf %2, %4 : vector<8x32xf32>
    %cst_5 = arith.constant 0.000000e+00 : f32
    %6 = vector.broadcast %cst_5 : f32 to vector<8x32xf32>
    %7 = arith.maximumf %5, %6 : vector<8x32xf32>
    %c0_6 = arith.constant 0 : index
    %c0_7 = arith.constant 0 : index
    %8 = vector.load %arg4[%c0_6, %c0_7] : memref<32x32xf32, #tpu.memory_space<vmem>>, vector<32x32xf32>
    %cst_8 = arith.constant dense<0.000000e+00> : vector<8x32xf32>
    %9 = tpu.matmul %7, %8, %cst_8 {dimension_numbers = #tpu.dot_dimension_numbers<[1], [0], [0], [1], [0, 0, 1, 1], [], []>} : vector<8x32xf32>, vector<32x32xf32>, vector<8x32xf32> -> vector<8x32xf32>
    %c0_9 = arith.constant 0 : index
    %c0_10 = arith.constant 0 : index
    %10 = vector.load %arg5[%c0_9, %c0_10] : memref<1x32xf32, #tpu.memory_space<vmem>>, vector<1x32xf32>
    %11 = vector.broadcast %10 : vector<1x32xf32> to vector<8x32xf32>
    %12 = arith.addf %9, %11 : vector<8x32xf32>
    %cst_11 = arith.constant 0.000000e+00 : f32
    %13 = vector.broadcast %cst_11 : f32 to vector<8x32xf32>
    %14 = arith.cmpf oge, %12, %13 : vector<8x32xf32>
    %cst_12 = arith.constant 0.00999999977 : f32
    %15 = vector.broadcast %cst_12 : f32 to vector<8x32xf32>
    %16 = arith.mulf %15, %12 : vector<8x32xf32>
    %17 = arith.select %14, %12, %16 : vector<8x32xi1>, vector<8x32xf32>
    %c0_13 = arith.constant 0 : index
    %c0_14 = arith.constant 0 : index
    %18 = vector.load %arg6[%c0_13, %c0_14] : memref<32x16xf32, #tpu.memory_space<vmem>>, vector<32x16xf32>
    %cst_15 = arith.constant dense<0.000000e+00> : vector<8x16xf32>
    %19 = tpu.matmul %17, %18, %cst_15 {dimension_numbers = #tpu.dot_dimension_numbers<[1], [0], [0], [1], [0, 0, 1, 1], [], []>} : vector<8x32xf32>, vector<32x16xf32>, vector<8x16xf32> -> vector<8x16xf32>
    %c0_16 = arith.constant 0 : index
    %c0_17 = arith.constant 0 : index
    %20 = vector.load %arg7[%c0_16, %c0_17] : memref<1x16xf32, #tpu.memory_space<vmem>>, vector<1x16xf32>
    %21 = vector.broadcast %20 : vector<1x16xf32> to vector<8x16xf32>
    %22 = arith.addf %19, %21 : vector<8x16xf32>
    %c0_18 = arith.constant 0 : index
    %c0_19 = arith.constant 0 : index
    %23 = vector.load %arg8[%c0_18, %c0_19] : memref<8x16xf32, #tpu.memory_space<vmem>>, vector<8x16xf32>
    tpu.vector_store %arg8[%c0_18, %c0_19], %22 {strides = array<i32>} : memref<8x16xf32, #tpu.memory_space<vmem>>, vector<8x16xf32>,
    return
  }
  func.func @transform_0(%arg0: i32) -> (i32, i32) {
    %c0_i32 = arith.constant 0 : i32
    %c0_i32_0 = arith.constant 0 : i32
    return %arg0, %c0_i32 : i32, i32
  }
  func.func @transform_1(%arg0: i32) -> (i32, i32) {
    %c0_i32 = arith.constant 0 : i32
    %c0_i32_0 = arith.constant 0 : i32
    %c0_i32_1 = arith.constant 0 : i32
    return %c0_i32, %c0_i32_0 : i32, i32
  }
  func.func @transform_2(%arg0: i32) -> (i32, i32) {
    %c0_i32 = arith.constant 0 : i32
    %c0_i32_0 = arith.constant 0 : i32
    %c0_i32_1 = arith.constant 0 : i32
    return %c0_i32, %c0_i32_0 : i32, i32
  }
  func.func @transform_3(%arg0: i32) -> (i32, i32) {
    %c0_i32 = arith.constant 0 : i32
    %c0_i32_0 = arith.constant 0 : i32
    %c0_i32_1 = arith.constant 0 : i32
    return %c0_i32, %c0_i32_0 : i32, i32
  }
  func.func @transform_4(%arg0: i32) -> (i32, i32) {
    %c0_i32 = arith.constant 0 : i32
    %c0_i32_0 = arith.constant 0 : i32
    %c0_i32_1 = arith.constant 0 : i32
    return %c0_i32, %c0_i32_0 : i32, i32
  }
  func.func @transform_5(%arg0: i32) -> (i32, i32) {
    %c0_i32 = arith.constant 0 : i32
    %c0_i32_0 = arith.constant 0 : i32
    %c0_i32_1 = arith.constant 0 : i32
    return %c0_i32, %c0_i32_0 : i32, i32
  }
  func.func @transform_6(%arg0: i32) -> (i32, i32) {
    %c0_i32 = arith.constant 0 : i32
    %c0_i32_0 = arith.constant 0 : i32
    %c0_i32_1 = arith.constant 0 : i32
    return %c0_i32, %c0_i32_0 : i32, i32
  }
  func.func @transform_7(%arg0: i32) -> (i32, i32) {
    %c0_i32 = arith.constant 0 : i32
    %c0_i32_0 = arith.constant 0 : i32
    return %arg0, %c0_i32 : i32, i32
  }
}

</mosaic_0001>

<llo_original>
// kernel: generator_enc_forward.1
$region0: #{generator_enc_forward.1}
  #allocation0 [shape = 'u32[]', space=smem, size = 0x4, offset = 0x4, fixed_abs, tag = 'smem constant byte address 0x4 - core index']
  #allocation1 [shape = 'u32[144,128]{1,0:T(1,128)}', space=vmem, size = 0x12000, scoped, tag = 'internal scratch']
  %s0 = inlined_call_operand.hbm [shape: f32[8,32], index: 0, kind: input, shape index: {}]
  %s1 = inlined_call_operand.vmem [shape: f32[32,32], index: 1, kind: input, shape index: {}]
  %s2 = inlined_call_operand.vmem [shape: f32[1,32], index: 2, kind: input, shape index: {}]
  %s3 = inlined_call_operand.vmem [shape: f32[32,32], index: 3, kind: input, shape index: {}]
  %s4 = inlined_call_operand.vmem [shape: f32[1,32], index: 4, kind: input, shape index: {}]
  %s5 = inlined_call_operand.vmem [shape: f32[32,16], index: 5, kind: input, shape index: {}]
  %s6 = inlined_call_operand.hbm [shape: f32[1,16], index: 6, kind: input, shape index: {}]
  %s7 = inlined_call_operand.hbm [shape: f32[8,16], index: 7, kind: output, shape index: {}]
  %s8 = sld [smem:[#allocation0]]
  $region46: #{generator_enc_forward.1} parent=0
    _
  %s10 = ssub.s32 1, %s8
  %s11 = scalar_select 0, %s10, %s8
  $region1: #{generator_enc_forward.1} parent=0
    #allocation2 [shape = 'u8[4096]{0}', space=vmem, size = 0x1000, scoped, tag = 'input window, operand 0, single buffered']
    #allocation3 [shape = 's32[1]{0}', space=sflag, size = 0x4, scoped, tag = 'scoped memory for generator_enc_forward.1']
    #allocation4 [shape = 's32[1]{0}', space=sflag, size = 0x4, scoped, tag = 'scoped memory for generator_enc_forward.1']
    #allocation5 [shape = 'u8[512]{0}', space=vmem, size = 0x400, scoped, tag = 'input window, operand 6, single buffered']
    #allocation6 [shape = 's32[1]{0}', space=sflag, size = 0x4, scoped, tag = 'scoped memory for generator_enc_forward.1']
    #allocation7 [shape = 'u8[4096]{0}', space=vmem, size = 0x1000, scoped, tag = 'output window, operand 0, single buffered']
    %12 = vsyncpa [#allocation3], 0
    %13 = vsyncpa [#allocation6], 0
    %14 = vsyncpa [#allocation4], 0
    // Predicated region
    $region2: #{generator_enc_forward.1} parent=1 // pred_check
      _
    $region3: #{generator_enc_forward.1} parent=1 // pred_check_branch
      %16 = sbr.rel (0) target = $region5
    $region4: #{generator_enc_forward.1} parent=1 // pred_region
      %s18 = ssub.s32 128, 128
      %19 = vsyncadd [#allocation3], %s18
      %s21 = sshll.u32 [#allocation2], 4
      %s22 = int_to_ptr.vmem [resolvable:$true] %s21
      %24 = dma.hbm_to_vmem [thread:$0]  %s0, 128, %s22, [#allocation3]
    $region5: #{generator_enc_forward.1} parent=1 // pred_fallthru
      _
    // Predicated region
    $region6: #{generator_enc_forward.1} parent=1 // pred_check
      _
    $region7: #{generator_enc_forward.1} parent=1 // pred_check_branch
      %26 = sbr.rel (0) target = $region9
    $region8: #{generator_enc_forward.1} parent=1 // pred_region
      _
    $region9: #{generator_enc_forward.1} parent=1 // pred_fallthru
      _
    // Predicated region
    $region10: #{generator_enc_forward.1} parent=1 // pred_check
      _
    $region11: #{generator_enc_forward.1} parent=1 // pred_check_branch
      %28 = sbr.rel (0) target = $region13
    $region12: #{generator_enc_forward.1} parent=1 // pred_region
      _
    $region13: #{generator_enc_forward.1} parent=1 // pred_fallthru
      _
    // Predicated region
    $region14: #{generator_enc_forward.1} parent=1 // pred_check
      _
    $region15: #{generator_enc_forward.1} parent=1 // pred_check_branch
      %30 = sbr.rel (0) target = $region17
    $region16: #{generator_enc_forward.1} parent=1 // pred_region
      _
    $region17: #{generator_enc_forward.1} parent=1 // pred_fallthru
      _
    // Predicated region
    $region18: #{generator_enc_forward.1} parent=1 // pred_check
      _
    $region19: #{generator_enc_forward.1} parent=1 // pred_check_branch
      %32 = sbr.rel (0) target = $region21
    $region20: #{generator_enc_forward.1} parent=1 // pred_region
      _
    $region21: #{generator_enc_forward.1} parent=1 // pred_fallthru
      _
    // Predicated region
    $region22: #{generator_enc_forward.1} parent=1 // pred_check
      _
    $region23: #{generator_enc_forward.1} parent=1 // pred_check_branch
      %34 = sbr.rel (0) target = $region25
    $region24: #{generator_enc_forward.1} parent=1 // pred_region
      _
    $region25: #{generator_enc_forward.1} parent=1 // pred_fallthru
      _
    // Predicated region
    $region26: #{generator_enc_forward.1} parent=1 // pred_check
      _
    $region27: #{generator_enc_forward.1} parent=1 // pred_check_branch
      %36 = sbr.rel (0) target = $region29
    $region28: #{generator_enc_forward.1} parent=1 // pred_region
      %s38 = ssub.s32 16, 16
      %39 = vsyncadd [#allocation6], %s38
      %s41 = sshll.u32 [#allocation5], 4
      %s42 = int_to_ptr.vmem [resolvable:$true] %s41
      %44 = dma.hbm_to_vmem [thread:$0]  %s6, 16, %s42, [#allocation6]
    $region29: #{generator_enc_forward.1} parent=1 // pred_fallthru
      _
    // Predicated region
    $region30: #{generator_enc_forward.1} parent=1 // pred_check
      _
    $region31: #{generator_enc_forward.1} parent=1 // pred_check_branch
      %46 = sbr.rel (0) target = $region33
    $region32: #{generator_enc_forward.1} parent=1 // pred_region
      %47 = dma.done [#allocation3], 128
    $region33: #{generator_enc_forward.1} parent=1 // pred_fallthru
      _
    // Predicated region
    $region34: #{generator_enc_forward.1} parent=1 // pred_check
      _
    $region35: #{generator_enc_forward.1} parent=1 // pred_check_branch
      %49 = sbr.rel (0) target = $region37
    $region36: #{generator_enc_forward.1} parent=1 // pred_region
      %50 = dma.done [#allocation6], 16
    $region37: #{generator_enc_forward.1} parent=1 // pred_fallthru
      _
    %v51 = vld [vmem:[#allocation2] sm:$0xff]
    %v52 = vld [vmem:[%s1] sm:$0xff]
    %v53 = vld [vmem:[%s1 + $0x8] sm:$0xff]
    %v54 = vld [vmem:[%s1 + $0x10] sm:$0xff]
    %v55 = vld [vmem:[%s1 + $0x18] sm:$0xff]
    %v56 = vld [vmem:[%s2] sm:$0x1]
    %v58 = vlaneseq
    %v59 = vshrl.u32 %v58, 7
    %v60 = vsub.s32 0, %v59
    %v61 = vrot.slane %v56, %v60
    %vm63 = vcmask 261120
    %v65 = vsel %vm63, %v51, 0
    %67 = vmatprep.subr.mxu0 0.0
    %68 = vmatpush1.msra.mxu0 %v52
    %69 = vmatprep.subr.mxu0 0.0
    %70 = vmatpush1.msra.mxu0 %v53
    %71 = vmatprep.subr.mxu0 0.0
    %72 = vmatpush1.msra.mxu0 %v54
    %73 = vmatprep.subr.mxu0 0.0
    %74 = vmatpush1.msra.mxu0 %v55
    %75 = vmatprep.subr.mxu0 0.0
    %76 = vmatpush1.msra.mxu0 0.0
    %77 = vmatprep.subr.mxu0 0.0
    %78 = vmatpush1.msra.mxu0 0.0
    %79 = vmatprep.subr.mxu0 0.0
    %80 = vmatpush1.msra.mxu0 0.0
    %81 = vmatprep.subr.mxu0 0.0
    %82 = vmatpush1.msra.mxu0 0.0
    %83 = vmatprep.subr.mxu0 0.0
    %84 = vmatpush1.msra.mxu0 0.0
    %85 = vmatprep.subr.mxu0 0.0
    %86 = vmatpush1.msra.mxu0 0.0
    %87 = vmatprep.subr.mxu0 0.0
    %88 = vmatpush1.msra.mxu0 0.0
    %89 = vmatprep.subr.mxu0 0.0
    %90 = vmatpush1.msra.mxu0 0.0
    %91 = vmatprep.subr.mxu0 0.0
    %92 = vmatpush1.msra.mxu0 0.0
    %93 = vmatprep.subr.mxu0 0.0
    %94 = vmatpush1.msra.mxu0 0.0
    %95 = vmatprep.subr.mxu0 0.0
    %96 = vmatpush1.msra.mxu0 0.0
    %97 = vmatprep.subr.mxu0 0.0
    %98 = vmatpush1.msra.mxu0 0.0
    %99 = vmatprep.subr.mxu0 0.0
    %100 = vmatpush1.msra.mxu0 0.0
    %101 = vmatprep.subr.mxu0 0.0
    %102 = vmatpush1.msra.mxu0 0.0
    %103 = vmatprep.subr.mxu0 0.0
    %104 = vmatpush1.msra.mxu0 0.0
    %105 = vmatprep.subr.mxu0 0.0
    %106 = vmatpush1.msra.mxu0 0.0
    %107 = vmatprep.subr.mxu0 0.0
    %108 = vmatpush1.msra.mxu0 0.0
    %109 = vmatprep.subr.mxu0 0.0
    %110 = vmatpush1.msra.mxu0 0.0
    %111 = vmatprep.subr.mxu0 0.0
    %112 = vmatpush1.msra.mxu0 0.0
    %113 = vmatprep.subr.mxu0 0.0
    %114 = vmatpush1.msra.mxu0 0.0
    %115 = vmatprep.subr.mxu0 0.0
    %116 = vmatpush1.msra.mxu0 0.0
    %117 = vmatprep.subr.mxu0 0.0
    %118 = vmatpush1.msra.mxu0 0.0
    %119 = vmatprep.subr.mxu0 0.0
    %120 = vmatpush1.msra.mxu0 0.0
    %121 = vmatprep.subr.mxu0 0.0
    %122 = vmatpush1.msra.mxu0 0.0
    %123 = vmatprep.subr.mxu0 0.0
    %124 = vmatpush1.msra.mxu0 0.0
    %125 = vmatprep.subr.mxu0 0.0
    %126 = vmatpush1.msra.mxu0 0.0
    %127 = vmatprep.subr.mxu0 0.0
    %128 = vmatpush1.msra.mxu0 0.0
    %129 = vmatprep.subr.mxu0 0.0
    %130 = vmatpush1.msra.mxu0 0.0
    %131 = vmatprep.mubr.f32.mxu0 0.0
    %132 = vmatmul.mubr.f32.gmra.mrb[0].mxu0 %v65
    %v133 = vpop.f32.mrb[0].mxu0
    %v134 = vadd.f32 %v61, %v133
    %v135 = vpop.f32.mrb[0].mxu0
    %136 = vdwg.mxu0
    %v137 = vmax.f32 %v134, 0.0
    %v138 = vld [vmem:[%s3] sm:$0xff]
    %v139 = vld [vmem:[%s3 + $0x8] sm:$0xff]
    %v140 = vld [vmem:[%s3 + $0x10] sm:$0xff]
    %v141 = vld [vmem:[%s3 + $0x18] sm:$0xff]
    %v142 = vld [vmem:[%s4] sm:$0x1]
    %v144 = vlaneseq
    %v145 = vshrl.u32 %v144, 7
    %v146 = vsub.s32 0, %v145
    %v147 = vrot.slane %v142, %v146
    %v150 = vsel %vm63, %v137, 0
    %152 = vmatprep.subr.mxu0 0.0
    %153 = vmatpush1.msra.mxu0 %v138
    %154 = vmatprep.subr.mxu0 0.0
    %155 = vmatpush1.msra.mxu0 %v139
    %156 = vmatprep.subr.mxu0 0.0
    %157 = vmatpush1.msra.mxu0 %v140
    %158 = vmatprep.subr.mxu0 0.0
    %159 = vmatpush1.msra.mxu0 %v141
    %160 = vmatprep.subr.mxu0 0.0
    %161 = vmatpush1.msra.mxu0 0.0
    %162 = vmatprep.subr.mxu0 0.0
    %163 = vmatpush1.msra.mxu0 0.0
    %164 = vmatprep.subr.mxu0 0.0
    %165 = vmatpush1.msra.mxu0 0.0
    %166 = vmatprep.subr.mxu0 0.0
    %167 = vmatpush1.msra.mxu0 0.0
    %168 = vmatprep.subr.mxu0 0.0
    %169 = vmatpush1.msra.mxu0 0.0
    %170 = vmatprep.subr.mxu0 0.0
    %171 = vmatpush1.msra.mxu0 0.0
    %172 = vmatprep.subr.mxu0 0.0
    %173 = vmatpush1.msra.mxu0 0.0
    %174 = vmatprep.subr.mxu0 0.0
    %175 = vmatpush1.msra.mxu0 0.0
    %176 = vmatprep.subr.mxu0 0.0
    %177 = vmatpush1.msra.mxu0 0.0
    %178 = vmatprep.subr.mxu0 0.0
    %179 = vmatpush1.msra.mxu0 0.0
    %180 = vmatprep.subr.mxu0 0.0
    %181 = vmatpush1.msra.mxu0 0.0
    %182 = vmatprep.subr.mxu0 0.0
    %183 = vmatpush1.msra.mxu0 0.0
    %184 = vmatprep.subr.mxu0 0.0
    %185 = vmatpush1.msra.mxu0 0.0
    %186 = vmatprep.subr.mxu0 0.0
    %187 = vmatpush1.msra.mxu0 0.0
    %188 = vmatprep.subr.mxu0 0.0
    %189 = vmatpush1.msra.mxu0 0.0
    %190 = vmatprep.subr.mxu0 0.0
    %191 = vmatpush1.msra.mxu0 0.0
    %192 = vmatprep.subr.mxu0 0.0
    %193 = vmatpush1.msra.mxu0 0.0
    %194 = vmatprep.subr.mxu0 0.0
    %195 = vmatpush1.msra.mxu0 0.0
    %196 = vmatprep.subr.mxu0 0.0
    %197 = vmatpush1.msra.mxu0 0.0
    %198 = vmatprep.subr.mxu0 0.0
    %199 = vmatpush1.msra.mxu0 0.0
    %200 = vmatprep.subr.mxu0 0.0
    %201 = vmatpush1.msra.mxu0 0.0
    %202 = vmatprep.subr.mxu0 0.0
    %203 = vmatpush1.msra.mxu0 0.0
    %204 = vmatprep.subr.mxu0 0.0
    %205 = vmatpush1.msra.mxu0 0.0
    %206 = vmatprep.subr.mxu0 0.0
    %207 = vmatpush1.msra.mxu0 0.0
    %208 = vmatprep.subr.mxu0 0.0
    %209 = vmatpush1.msra.mxu0 0.0
    %210 = vmatprep.subr.mxu0 0.0
    %211 = vmatpush1.msra.mxu0 0.0
    %212 = vmatprep.subr.mxu0 0.0
    %213 = vmatpush1.msra.mxu0 0.0
    %214 = vmatprep.subr.mxu0 0.0
    %215 = vmatpush1.msra.mxu0 0.0
    %216 = vmatprep.mubr.f32.mxu0 0.0
    %217 = vmatmul.mubr.f32.gmra.mrb[0].mxu0 %v150
    %v218 = vpop.f32.mrb[0].mxu0
    %v219 = vadd.f32 %v147, %v218
    %v220 = vpop.f32.mrb[0].mxu0
    %221 = vdwg.mxu0
    %vm222 = vcmp.ge.f32.partialorder %v219, 0.0
    %v223 = vmul.f32 %v219, 0.01
    %v224 = vsel %vm222, %v219, %v223
    %v225 = vld [vmem:[%s5] sm:$0xff]
    %v226 = vld [vmem:[%s5 + $0x8] sm:$0xff]
    %v227 = vld [vmem:[%s5 + $0x10] sm:$0xff]
    %v228 = vld [vmem:[%s5 + $0x18] sm:$0xff]
    %v229 = vld [vmem:[#allocation5] sm:$0x1]
    %v231 = vlaneseq
    %v232 = vshrl.u32 %v231, 7
    %v233 = vsub.s32 0, %v232
    %v234 = vrot.slane %v229, %v233
    %v237 = vsel %vm63, %v224, 0
    %239 = vmatprep.subr.mxu0 0.0
    %240 = vmatpush1.msra.mxu0 %v225
    %241 = vmatprep.subr.mxu0 0.0
    %242 = vmatpush1.msra.mxu0 %v226
    %243 = vmatprep.subr.mxu0 0.0
    %244 = vmatpush1.msra.mxu0 %v227
    %245 = vmatprep.subr.mxu0 0.0
    %246 = vmatpush1.msra.mxu0 %v228
    %247 = vmatprep.subr.mxu0 0.0
    %248 = vmatpush1.msra.mxu0 0.0
    %249 = vmatprep.subr.mxu0 0.0
    %250 = vmatpush1.msra.mxu0 0.0
    %251 = vmatprep.subr.mxu0 0.0
    %252 = vmatpush1.msra.mxu0 0.0
    %253 = vmatprep.subr.mxu0 0.0
    %254 = vmatpush1.msra.mxu0 0.0
    %255 = vmatprep.subr.mxu0 0.0
    %256 = vmatpush1.msra.mxu0 0.0
    %257 = vmatprep.subr.mxu0 0.0
    %258 = vmatpush1.msra.mxu0 0.0
    %259 = vmatprep.subr.mxu0 0.0
    %260 = vmatpush1.msra.mxu0 0.0
    %261 = vmatprep.subr.mxu0 0.0
    %262 = vmatpush1.msra.mxu0 0.0
    %263 = vmatprep.subr.mxu0 0.0
    %264 = vmatpush1.msra.mxu0 0.0
    %265 = vmatprep.subr.mxu0 0.0
    %266 = vmatpush1.msra.mxu0 0.0
    %267 = vmatprep.subr.mxu0 0.0
    %268 = vmatpush1.msra.mxu0 0.0
    %269 = vmatprep.subr.mxu0 0.0
    %270 = vmatpush1.msra.mxu0 0.0
    %271 = vmatprep.subr.mxu0 0.0
    %272 = vmatpush1.msra.mxu0 0.0
    %273 = vmatprep.subr.mxu0 0.0
    %274 = vmatpush1.msra.mxu0 0.0
    %275 = vmatprep.subr.mxu0 0.0
    %276 = vmatpush1.msra.mxu0 0.0
    %277 = vmatprep.subr.mxu0 0.0
    %278 = vmatpush1.msra.mxu0 0.0
    %279 = vmatprep.subr.mxu0 0.0
    %280 = vmatpush1.msra.mxu0 0.0
    %281 = vmatprep.subr.mxu0 0.0
    %282 = vmatpush1.msra.mxu0 0.0
    %283 = vmatprep.subr.mxu0 0.0
    %284 = vmatpush1.msra.mxu0 0.0
    %285 = vmatprep.subr.mxu0 0.0
    %286 = vmatpush1.msra.mxu0 0.0
    %287 = vmatprep.subr.mxu0 0.0
    %288 = vmatpush1.msra.mxu0 0.0
    %289 = vmatprep.subr.mxu0 0.0
    %290 = vmatpush1.msra.mxu0 0.0
    %291 = vmatprep.subr.mxu0 0.0
    %292 = vmatpush1.msra.mxu0 0.0
    %293 = vmatprep.subr.mxu0 0.0
    %294 = vmatpush1.msra.mxu0 0.0
    %295 = vmatprep.subr.mxu0 0.0
    %296 = vmatpush1.msra.mxu0 0.0
    %297 = vmatprep.subr.mxu0 0.0
    %298 = vmatpush1.msra.mxu0 0.0
    %299 = vmatprep.subr.mxu0 0.0
    %300 = vmatpush1.msra.mxu0 0.0
    %301 = vmatprep.subr.mxu0 0.0
    %302 = vmatpush1.msra.mxu0 0.0
    %303 = vmatprep.mubr.f32.mxu0 0.0
    %304 = vmatmul.mubr.f32.gmra.mrb[0].mxu0 %v237
    %v305 = vpop.f32.mrb[0].mxu0
    %v306 = vadd.f32 %v234, %v305
    %v307 = vpop.f32.mrb[0].mxu0
    %308 = vdwg.mxu0
    %vm309 = vcmask 130048
    %310 = vst.msk [vmem:[#allocation7] sm:$0xff] %vm309, %v306
    // Predicated region
    $region38: #{generator_enc_forward.1} parent=1 // pred_check
      _
    $region39: #{generator_enc_forward.1} parent=1 // pred_check_branch
      %312 = sbr.rel (0) target = $region41
    $region40: #{generator_enc_forward.1} parent=1 // pred_region
      %s314 = ssub.s32 128, 128
      %315 = vsyncadd [#allocation4], %s314
      %s317 = sshll.u32 [#allocation7], 4
      %s318 = int_to_ptr.vmem [resolvable:$true] %s317
      %320 = dma.vmem_to_hbm [thread:$0]  %s318, 128, %s7, [#allocation4]
    $region41: #{generator_enc_forward.1} parent=1 // pred_fallthru
      _
    // Predicated region
    $region42: #{generator_enc_forward.1} parent=1 // pred_check
      _
    $region43: #{generator_enc_forward.1} parent=1 // pred_check_branch
      %322 = sbr.rel (0) target = $region45
    $region44: #{generator_enc_forward.1} parent=1 // pred_region
      %323 = dma.done [#allocation4], 128
    $region45: #{generator_enc_forward.1} parent=1 // pred_fallthru
      _
    %324 = vsyncpa [#allocation3], 1
    %325 = vsyncpa [#allocation6], 1
    %326 = vsyncpa [#allocation4], 1

</llo_original>
